<compile_context>
chip_gen: v6e
topology: v6e:2x2x1
jax: 0.10.0
libtpu: 0.0.40
codegen_flags: <defaults>
</compile_context>

<pallas_src>
import functools

import jax
import jax.numpy as jnp
from jax.experimental import pallas as pl
from jax.experimental.pallas import tpu as pltpu


# ---------------------------------------------------------------------------
# Kernels
# ---------------------------------------------------------------------------

def _fused_bn_kernel(x_ref, w_ref, b_ref, y_ref, mean_ref, var_ref,
                     *, eps, inv_nhw):
    """Single-pass BN for one channel tile: stats + normalize, x read once from HBM.

    x_ref : (N, TC, HW)   w_ref/b_ref : (TC, 1) f32
    y_ref : (N, TC, HW)   mean_ref/var_ref : (TC, 1) f32
    """
    nb = x_ref.shape[0]
    zeros = jnp.zeros(x_ref.shape[1:], jnp.float32)       # (TC, HW)

    # ---- mean (lane-dense VPU accumulation, one XLU reduce) ----
    def sum_body(i, acc):
        return acc + x_ref[i].astype(jnp.float32)
    s_acc = jax.lax.fori_loop(0, nb, sum_body, zeros)
    mean = jnp.sum(s_acc, axis=-1, keepdims=True) * inv_nhw            # (TC, 1)

    # ---- variance: shifted form (x - mean)^2 -> no catastrophic cancellation
    def var_body(i, acc):
        d = x_ref[i].astype(jnp.float32) - mean
        return acc + d * d
    q_acc = jax.lax.fori_loop(0, nb, var_body, zeros)
    var = jnp.sum(q_acc, axis=-1, keepdims=True) * inv_nhw             # biased

    # ---- folded affine constants (per-channel glue lives in-kernel) ----
    scale = jax.lax.rsqrt(var + eps) * w_ref[...]                      # (TC, 1)
    shift = b_ref[...] - mean * scale
    mean_ref[...] = mean
    var_ref[...] = var

    # ---- normalize: one mul + one add per element ----
    def norm_body(i, carry):
        y_ref[i] = (x_ref[i].astype(jnp.float32) * scale + shift).astype(y_ref.dtype)
        return carry
    jax.lax.fori_loop(0, nb, norm_body, 0)


def _stats_kernel(x_ref, sum_ref, ssq_ref, sum_acc, ssq_acc):
    """Two-pass fallback, pass 1: per-channel sum(x) / sum(x*x).

    Lane-dense (TC, TL) accumulators: per grid step only VPU adds; the single
    cross-lane reduce happens at the finalize step.
    """
    n = pl.program_id(1)
    l = pl.program_id(2)

    @pl.when(jnp.logical_and(n == 0, l == 0))
    def _():
        sum_acc[...] = jnp.zeros_like(sum_acc)
        ssq_acc[...] = jnp.zeros_like(ssq_acc)

    def body(i, carry):
        x = x_ref[i].astype(jnp.float32)                   # (TC, TL)
        sum_acc[...] += x
        ssq_acc[...] += x * x
        return carry
    jax.lax.fori_loop(0, x_ref.shape[0], body, 0)

    @pl.when(jnp.logical_and(n == pl.num_programs(1) - 1,
                             l == pl.num_programs(2) - 1))
    def _():
        sum_ref[...] = jnp.sum(sum_acc[...], axis=-1, keepdims=True)
        ssq_ref[...] = jnp.sum(ssq_acc[...], axis=-1, keepdims=True)


def _norm_kernel(x_ref, sum_ref, ssq_ref, w_ref, b_ref, y_ref, *, eps, inv_nhw):
    """Two-pass fallback, pass 2: per-channel glue folded in, then y = x*scale+shift."""
    mean = sum_ref[...] * inv_nhw                                       # (TC, 1)
    # TODO(synk): E[x^2]-E[x]^2 can cancel for large |mean|/std; the fused path
    # uses the shifted variance, this fallback keeps the f32-accumulated form.
    var = jnp.maximum(ssq_ref[...] * inv_nhw - mean * mean, 0.0)
    scale = jax.lax.rsqrt(var + eps) * w_ref[...]
    shift = b_ref[...] - mean * scale

    def body(i, carry):
        y_ref[i] = (x_ref[i].astype(jnp.float32) * scale + shift).astype(y_ref.dtype)
        return carry
    jax.lax.fori_loop(0, x_ref.shape[0], body, 0)


# ---------------------------------------------------------------------------
# Tile selection (generation-aware via VMEM capacity)
# ---------------------------------------------------------------------------

def _vmem_capacity_bytes():
    try:
        info = pltpu.get_tpu_info()
        for name in ("vmem_capacity_bytes", "vmem_bytes"):
            cap = getattr(info, name, None)
            if cap:
                return int(cap)
    except Exception:
        pass
    return 64 * 1024 * 1024        # conservative (v7x per-TensorCore VMEM)


def _channel_tile_candidates(C, cap=512):
    cands = [t for t in range(8, min(C, cap) + 1, 8) if C % t == 0]
    if C <= cap:
        cands.append(C)            # full-extent block dim is always legal
    if not cands:
        cands = [C]
    return sorted(set(cands))


def _pick_fused_channel_tile(N, C, HW, x_bytes, vmem_budget):
    """Largest channel tile whose fused working set fits; None -> use two-pass."""
    cands = _channel_tile_candidates(C)

    def fused_bytes(tc):
        blk = N * tc * HW * x_bytes
        # in + out blocks, double-buffered, plus f32 accumulators/temporaries.
        return 4 * blk + 4 * tc * HW * 4

    fitting = [t for t in cands if fused_bytes(t) <= vmem_budget]
    if not fitting:
        return None
    # Prefer >=2 channel tiles (v7x megacore sharding) while slabs stay >=512 KiB.
    multi = [t for t in fitting
             if C // t >= 2 and N * t * HW * x_bytes >= (512 << 10)]
    pool = multi if multi else fitting
    return max(pool)


def _pick_tiles_two_pass(N, C, HW, x_bytes, block_budget):
    """(Nb, TC, TL) for the two-pass path: lane-dense, >=1 MiB blocks when possible."""
    tc_cands = _channel_tile_candidates(C)
    if HW % 128 == 0:
        tl_cands = sorted({t for t in (128, 256, 512, 1024, 2048, 4096, HW)
                           if t <= HW and HW % t == 0})
    else:
        tl_cands = [HW]            # full extent (only legal non-multiple-of-128 choice)
    nb_cands = [n for n in range(1, N + 1) if N % n == 0]

    best = None
    best_cfg = None
    for tc in tc_cands:
        for tl in tl_cands:
            for nb in nb_cands:
                blk = nb * tc * tl * x_bytes
                if blk > block_budget:
                    continue
                big_enough = blk >= (1 << 20)
                multi_tile = (C // tc) >= 2
                # Among big-enough blocks prefer multi channel tiles then the
                # smallest such block; otherwise prefer the largest block.
                score = (big_enough, multi_tile, -blk if big_enough else blk)
                if best is None or score > best:
                    best, best_cfg = score, (nb, tc, tl)
    if best_cfg is None:                                   # pathological shapes
        best_cfg = (1, tc_cands[0], tl_cands[0])
    return best_cfg


# ---------------------------------------------------------------------------
# Wrapper
# ---------------------------------------------------------------------------

def meta_batch_norm_2d(x, weight, bias, running_mean, running_var,
                       *, eps=1e-5, momentum=0.1, force_two_pass=False):
    """x: (N, C, H, W). Returns (y, new_running_mean, new_running_var)."""
    N, C, H, W = x.shape
    HW = H * W
    nhw = N * HW
    inv_nhw = 1.0 / nhw

    x3 = x.reshape(N, C, HW)              # free reshape, native NCHW layout
    x_bytes = x.dtype.itemsize

    vmem_cap = _vmem_capacity_bytes()
    vmem_limit = int(min(int(0.75 * vmem_cap), 96 * 1024 * 1024))
    vmem_budget = int(0.55 * vmem_cap)

    w32 = weight.astype(jnp.float32).reshape(C, 1)
    b32 = bias.astype(jnp.float32).reshape(C, 1)

    fused_tc = None if force_two_pass else _pick_fused_channel_tile(
        N, C, HW, x_bytes, vmem_budget)

    if fused_tc is not None:
        # ---------------- Fused single-pass path (2x |x| HBM traffic) --------
        TC = fused_tc
        y3, mean2, var2 = pl.pallas_call(
            functools.partial(_fused_bn_kernel, eps=float(eps),
                              inv_nhw=float(inv_nhw)),
            out_shape=(
                jax.ShapeDtypeStruct((N, C, HW), x.dtype),
                jax.ShapeDtypeStruct((C, 1), jnp.float32),
                jax.ShapeDtypeStruct((C, 1), jnp.float32),
            ),
            grid_spec=pltpu.PrefetchScalarGridSpec(
                num_scalar_prefetch=0,
                grid=(C // TC,),
                in_specs=[
                    pl.BlockSpec((N, TC, HW), lambda c: (0, c, 0)),
                    pl.BlockSpec((TC, 1), lambda c: (c, 0)),
                    pl.BlockSpec((TC, 1), lambda c: (c, 0)),
                ],
                out_specs=(
                    pl.BlockSpec((N, TC, HW), lambda c: (0, c, 0)),
                    pl.BlockSpec((TC, 1), lambda c: (c, 0)),
                    pl.BlockSpec((TC, 1), lambda c: (c, 0)),
                ),
            ),
            compiler_params=pltpu.CompilerParams(
                dimension_semantics=("parallel",),
                vmem_limit_bytes=vmem_limit,
            ),
        )(x3, w32, b32)
        batch_mean = mean2[:, 0]
        batch_var = var2[:, 0]
    else:
        # ---------------- Two-pass fallback (huge activations) ---------------
        block_budget = min(8 * 1024 * 1024, max(vmem_budget // 6, 1 << 20))
        Nb, TC, TL = _pick_tiles_two_pass(N, C, HW, x_bytes, block_budget)
        grid = (C // TC, N // Nb, HW // TL)   # channel tiles first, reductions last

        sums, ssqs = pl.pallas_call(
            _stats_kernel,
            out_shape=(
                jax.ShapeDtypeStruct((C, 1), jnp.float32),
                jax.ShapeDtypeStruct((C, 1), jnp.float32),
            ),
            grid_spec=pltpu.PrefetchScalarGridSpec(
                num_scalar_prefetch=0,
                grid=grid,
                in_specs=[pl.BlockSpec((Nb, TC, TL), lambda c, n, l: (n, c, l))],
                out_specs=(
                    pl.BlockSpec((TC, 1), lambda c, n, l: (c, 0)),
                    pl.BlockSpec((TC, 1), lambda c, n, l: (c, 0)),
                ),
                scratch_shapes=[
                    pltpu.VMEM((TC, TL), jnp.float32),
                    pltpu.VMEM((TC, TL), jnp.float32),
                ],
            ),
            compiler_params=pltpu.CompilerParams(
                dimension_semantics=("parallel", "arbitrary", "arbitrary"),
                vmem_limit_bytes=vmem_limit,
            ),
        )(x3)

        y3 = pl.pallas_call(
            functools.partial(_norm_kernel, eps=float(eps),
                              inv_nhw=float(inv_nhw)),
            out_shape=jax.ShapeDtypeStruct((N, C, HW), x.dtype),
            grid_spec=pltpu.PrefetchScalarGridSpec(
                num_scalar_prefetch=0,
                grid=grid,
                in_specs=[
                    pl.BlockSpec((Nb, TC, TL), lambda c, n, l: (n, c, l)),
                    pl.BlockSpec((TC, 1), lambda c, n, l: (c, 0)),
                    pl.BlockSpec((TC, 1), lambda c, n, l: (c, 0)),
                    pl.BlockSpec((TC, 1), lambda c, n, l: (c, 0)),
                    pl.BlockSpec((TC, 1), lambda c, n, l: (c, 0)),
                ],
                out_specs=pl.BlockSpec((Nb, TC, TL), lambda c, n, l: (n, c, l)),
            ),
            compiler_params=pltpu.CompilerParams(
                dimension_semantics=("parallel", "parallel", "parallel"),
                vmem_limit_bytes=vmem_limit,
            ),
        )(x3, sums, ssqs, w32, b32)

        batch_mean = sums[:, 0] * inv_nhw
        batch_var = jnp.maximum(ssqs[:, 0] * inv_nhw - batch_mean * batch_mean, 0.0)

    y = y3.reshape(N, C, H, W)

    # Running-stat buffer update (training mode): PyTorch uses *unbiased* var.
    bv_unbiased = batch_var * (nhw / max(nhw - 1, 1))
    new_running_mean = ((1.0 - momentum) * running_mean
                        + momentum * batch_mean).astype(running_mean.dtype)
    new_running_var = ((1.0 - momentum) * running_var
                       + momentum * bv_unbiased).astype(running_var.dtype)
    return y, new_running_mean, new_running_var


# ---------------------------------------------------------------------------
# Reference + test
# ---------------------------------------------------------------------------

def _reference_bn(x, weight, bias, eps):
    xf = x.astype(jnp.float32)
    mean = jnp.mean(xf, axis=(0, 2, 3), keepdims=True)
    var = jnp.mean((xf - mean) ** 2, axis=(0, 2, 3), keepdims=True)
    w = weight.reshape(1, -1, 1, 1)
    b = bias.reshape(1, -1, 1, 1)
    return (xf - mean) * jax.lax.rsqrt(var + eps) * w + b


if __name__ == "__main__":
    key = jax.random.PRNGKey(0)
    kx, kw, kb = jax.random.split(key, 3)

    N, C, H, W = 2, 4, 16, 16
    x = jax.random.normal(kx, (N, C, H, W), dtype=jnp.float32)

    # MetaBatchNorm2d(num_features=C): weight=1, bias=0 by default; perturb
    # slightly (deterministically) for a non-trivial affine test.
    weight = 1.0 + 0.1 * jax.random.normal(kw, (C,), dtype=jnp.float32)
    bias = 0.1 * jax.random.normal(kb, (C,), dtype=jnp.float32)
    running_mean = jnp.zeros((C,), jnp.float32)
    running_var = jnp.ones((C,), jnp.float32)

    y_ref = _reference_bn(x, weight, bias, 1e-5)
    nhw = N * H * W
    bm = jnp.mean(x, axis=(0, 2, 3))
    bv = jnp.var(x, axis=(0, 2, 3)) * (nhw / (nhw - 1))
    rm_ref = 0.9 * running_mean + 0.1 * bm
    rv_ref = 0.9 * running_var + 0.1 * bv

    # Fused single-pass path (taken at these shapes).
    y, rm, rv = meta_batch_norm_2d(x, weight, bias, running_mean, running_var,
                                   eps=1e-5, momentum=0.1)
    jax.block_until_ready((y, rm, rv))
    assert jnp.allclose(y, y_ref, atol=1e-4, rtol=1e-4), "fused path mismatch"
    assert jnp.allclose(rm, rm_ref, atol=1e-5, rtol=1e-5)
    assert jnp.allclose(rv, rv_ref, atol=1e-4, rtol=1e-4)

    # Two-pass fallback path (forced) — validates the large-activation route.
    y2, rm2, rv2 = meta_batch_norm_2d(x, weight, bias, running_mean, running_var,
                                      eps=1e-5, momentum=0.1, force_two_pass=True)
    jax.block_until_ready((y2, rm2, rv2))
    assert jnp.allclose(y2, y_ref, atol=1e-4, rtol=1e-4), "two-pass path mismatch"
    assert jnp.allclose(rm2, rm_ref, atol=1e-5, rtol=1e-5)
    assert jnp.allclose(rv2, rv_ref, atol=1e-4, rtol=1e-4)

    print("KERNEL_OK")
</pallas_src>

<mosaic_0001>
module attributes {stable_mosaic.version = 11 : i64} {
  func.func @_fused_bn_kernel(%arg0: i32, %arg1: memref<2x4x256xf32, #tpu.memory_space<vmem>>, %arg2: memref<4x1xf32, #tpu.memory_space<vmem>>, %arg3: memref<4x1xf32, #tpu.memory_space<vmem>>, %arg4: memref<2x4x256xf32, #tpu.memory_space<vmem>>, %arg5: memref<4x1xf32, #tpu.memory_space<vmem>>, %arg6: memref<4x1xf32, #tpu.memory_space<vmem>>) attributes {dimension_semantics = [#tpu.dimension_semantics<parallel>], iteration_bounds = array<i64: 1>, scalar_prefetch = 0 : i64, scratch_operands = 0 : i64, tpu.core_type = #tpu.core_type<tc>, window_params = [{transform_indices = @transform_0, window_bounds = array<i64: 2, 4, 256>}, {transform_indices = @transform_1, window_bounds = array<i64: 4, 1>}, {transform_indices = @transform_2, window_bounds = array<i64: 4, 1>}, {transform_indices = @transform_3, window_bounds = array<i64: 2, 4, 256>}, {transform_indices = @transform_4, window_bounds = array<i64: 4, 1>}, {transform_indices = @transform_5, window_bounds = array<i64: 4, 1>}]} {
    %cst = arith.constant 0.000000e+00 : f32
    %0 = vector.broadcast %cst : f32 to vector<4x256xf32>
    %c0_i32 = arith.constant 0 : i32
    %c2_i32 = arith.constant 2 : i32
    %1 = arith.addi %c0_i32, %c2_i32 : i32
    %c1_i32 = arith.constant 1 : i32
    %2 = scf.for %arg7 = %c0_i32 to %1 step %c1_i32 iter_args(%arg8 = %0) -> (vector<4x256xf32>)  : i32 {
      %24 = arith.index_cast %arg7 : i32 to index
      %c0_21 = arith.constant 0 : index
      %c0_22 = arith.constant 0 : index
      %25 = vector.load %arg1[%24, %c0_21, %c0_22] : memref<2x4x256xf32, #tpu.memory_space<vmem>>, vector<1x4x256xf32>
      %26 = vector.shape_cast %25 : vector<1x4x256xf32> to vector<4x256xf32>
      %27 = arith.addf %arg8, %26 : vector<4x256xf32>
      scf.yield %27 : vector<4x256xf32>
    }
    %c2_i32_0 = arith.constant 2 : i32
    %cst_1 = arith.constant dense<0.000000e+00> : vector<4xf32>
    %3 = vector.multi_reduction <add>, %2, %cst_1 [1] : vector<4x256xf32> to vector<4xf32>
    %4 = vector.shape_cast %3 : vector<4xf32> to vector<4x1xf32>
    %cst_2 = arith.constant 0.001953125 : f32
    %5 = vector.broadcast %cst_2 : f32 to vector<4x1xf32>
    %6 = arith.mulf %4, %5 : vector<4x1xf32>
    %c0_i32_3 = arith.constant 0 : i32
    %c2_i32_4 = arith.constant 2 : i32
    %7 = arith.addi %c0_i32_3, %c2_i32_4 : i32
    %c1_i32_5 = arith.constant 1 : i32
    %8 = scf.for %arg7 = %c0_i32_3 to %7 step %c1_i32_5 iter_args(%arg8 = %0) -> (vector<4x256xf32>)  : i32 {
      %24 = arith.index_cast %arg7 : i32 to index
      %c0_21 = arith.constant 0 : index
      %c0_22 = arith.constant 0 : index
      %25 = vector.load %arg1[%24, %c0_21, %c0_22] : memref<2x4x256xf32, #tpu.memory_space<vmem>>, vector<1x4x256xf32>
      %26 = vector.shape_cast %25 : vector<1x4x256xf32> to vector<4x256xf32>
      %27 = vector.broadcast %6 : vector<4x1xf32> to vector<4x256xf32>
      %28 = arith.subf %26, %27 : vector<4x256xf32>
      %29 = arith.mulf %28, %28 : vector<4x256xf32>
      %30 = arith.addf %arg8, %29 : vector<4x256xf32>
      scf.yield %30 : vector<4x256xf32>
    }
    %c2_i32_6 = arith.constant 2 : i32
    %cst_7 = arith.constant dense<0.000000e+00> : vector<4xf32>
    %9 = vector.multi_reduction <add>, %8, %cst_7 [1] : vector<4x256xf32> to vector<4xf32>
    %10 = vector.shape_cast %9 : vector<4xf32> to vector<4x1xf32>
    %cst_8 = arith.constant 0.001953125 : f32
    %11 = vector.broadcast %cst_8 : f32 to vector<4x1xf32>
    %12 = arith.mulf %10, %11 : vector<4x1xf32>
    %cst_9 = arith.constant 9.99999974E-6 : f32
    %13 = vector.broadcast %cst_9 : f32 to vector<4x1xf32>
    %14 = arith.addf %12, %13 : vector<4x1xf32>
    %15 = math.rsqrt %14 : vector<4x1xf32>
    %c0 = arith.constant 0 : index
    %c0_10 = arith.constant 0 : index
    %16 = vector.load %arg2[%c0, %c0_10] : memref<4x1xf32, #tpu.memory_space<vmem>>, vector<4x1xf32>
    %17 = arith.mulf %15, %16 : vector<4x1xf32>
    %c0_11 = arith.constant 0 : index
    %c0_12 = arith.constant 0 : index
    %18 = vector.load %arg3[%c0_11, %c0_12] : memref<4x1xf32, #tpu.memory_space<vmem>>, vector<4x1xf32>
    %19 = arith.mulf %6, %17 : vector<4x1xf32>
    %20 = arith.subf %18, %19 : vector<4x1xf32>
    %c0_13 = arith.constant 0 : index
    %c0_14 = arith.constant 0 : index
    %21 = vector.load %arg5[%c0_13, %c0_14] : memref<4x1xf32, #tpu.memory_space<vmem>>, vector<4x1xf32>
    tpu.vector_store %arg5[%c0_13, %c0_14], %6 {strides = array<i32>} : memref<4x1xf32, #tpu.memory_space<vmem>>, vector<4x1xf32>,
    %c0_15 = arith.constant 0 : index
    %c0_16 = arith.constant 0 : index
    %22 = vector.load %arg6[%c0_15, %c0_16] : memref<4x1xf32, #tpu.memory_space<vmem>>, vector<4x1xf32>
    tpu.vector_store %arg6[%c0_15, %c0_16], %12 {strides = array<i32>} : memref<4x1xf32, #tpu.memory_space<vmem>>, vector<4x1xf32>,
    %c0_i32_17 = arith.constant 0 : i32
    %c2_i32_18 = arith.constant 2 : i32
    %23 = arith.addi %c0_i32_17, %c2_i32_18 : i32
    %c1_i32_19 = arith.constant 1 : i32
    scf.for %arg7 = %c0_i32_17 to %23 step %c1_i32_19  : i32 {
      %24 = arith.index_cast %arg7 : i32 to index
      %c0_21 = arith.constant 0 : index
      %c0_22 = arith.constant 0 : index
      %25 = vector.load %arg1[%24, %c0_21, %c0_22] : memref<2x4x256xf32, #tpu.memory_space<vmem>>, vector<1x4x256xf32>
      %26 = vector.shape_cast %25 : vector<1x4x256xf32> to vector<4x256xf32>
      %27 = vector.broadcast %17 : vector<4x1xf32> to vector<4x256xf32>
      %28 = arith.mulf %26, %27 : vector<4x256xf32>
      %29 = vector.broadcast %20 : vector<4x1xf32> to vector<4x256xf32>
      %30 = arith.addf %28, %29 : vector<4x256xf32>
      %31 = arith.index_cast %arg7 : i32 to index
      %c0_23 = arith.constant 0 : index
      %c0_24 = arith.constant 0 : index
      %32 = vector.load %arg4[%31, %c0_23, %c0_24] : memref<2x4x256xf32, #tpu.memory_space<vmem>>, vector<1x4x256xf32>
      %33 = vector.shape_cast %32 : vector<1x4x256xf32> to vector<4x256xf32>
      %34 = vector.shape_cast %30 : vector<4x256xf32> to vector<1x4x256xf32>
      tpu.vector_store %arg4[%31, %c0_23, %c0_24], %34 {strides = array<i32>} : memref<2x4x256xf32, #tpu.memory_space<vmem>>, vector<1x4x256xf32>,
    }
    %c2_i32_20 = arith.constant 2 : i32
    return
  }
  func.func @transform_0(%arg0: i32) -> (i32, i32, i32) {
    %c0_i32 = arith.constant 0 : i32
    %c0_i32_0 = arith.constant 0 : i32
    %c0_i32_1 = arith.constant 0 : i32
    return %c0_i32, %arg0, %c0_i32_0 : i32, i32, i32
  }
  func.func @transform_1(%arg0: i32) -> (i32, i32) {
    %c0_i32 = arith.constant 0 : i32
    %c0_i32_0 = arith.constant 0 : i32
    return %arg0, %c0_i32 : i32, i32
  }
  func.func @transform_2(%arg0: i32) -> (i32, i32) {
    %c0_i32 = arith.constant 0 : i32
    %c0_i32_0 = arith.constant 0 : i32
    return %arg0, %c0_i32 : i32, i32
  }
  func.func @transform_3(%arg0: i32) -> (i32, i32, i32) {
    %c0_i32 = arith.constant 0 : i32
    %c0_i32_0 = arith.constant 0 : i32
    %c0_i32_1 = arith.constant 0 : i32
    return %c0_i32, %arg0, %c0_i32_0 : i32, i32, i32
  }
  func.func @transform_4(%arg0: i32) -> (i32, i32) {
    %c0_i32 = arith.constant 0 : i32
    %c0_i32_0 = arith.constant 0 : i32
    return %arg0, %c0_i32 : i32, i32
  }
  func.func @transform_5(%arg0: i32) -> (i32, i32) {
    %c0_i32 = arith.constant 0 : i32
    %c0_i32_0 = arith.constant 0 : i32
    return %arg0, %c0_i32 : i32, i32
  }
}

</mosaic_0001>

<llo_original>
// kernel: tpu_custom_call.1
$region0: #{tpu_custom_call.1}
  #allocation0 [shape = 'u32[]', space=smem, size = 0x4, offset = 0x4, fixed_abs, tag = 'smem constant byte address 0x4 - core index']
  #allocation1 [shape = 'u32[144,128]{1,0:T(1,128)}', space=vmem, size = 0x12000, scoped, tag = 'internal scratch']
  %s0 = inlined_call_operand.hbm [shape: f32[2,4,256], index: 0, kind: input, shape index: {}]
  %s1 = inlined_call_operand.vmem [shape: f32[4,1], index: 1, kind: input, shape index: {}]
  %s2 = inlined_call_operand.vmem [shape: f32[4,1], index: 2, kind: input, shape index: {}]
  %s3 = inlined_call_operand.hbm [shape: f32[2,4,256], index: 3, kind: output, shape index: {0}]
  %s4 = inlined_call_operand.vmem [shape: f32[4,1], index: 4, kind: output, shape index: {1}]
  %s5 = inlined_call_operand.vmem [shape: f32[4,1], index: 5, kind: output, shape index: {2}]
  %6 = xla_tuple %s3, %s4, %s5
  %s7 = sld [smem:[#allocation0]]
  $region63: #{tpu_custom_call.1} parent=0
    _
  %s9 = ssub.s32 1, %s7
  %s10 = scalar_select 0, %s9, %s7
  $region1: #{tpu_custom_call.1} parent=0
    #allocation2 [shape = 'u8[8192]{0}', space=vmem, size = 0x2000, scoped, tag = 'input window, operand 0, single buffered']
    #allocation3 [shape = 's32[1]{0}', space=sflag, size = 0x4, scoped, tag = 'scoped memory for tpu_custom_call.1']
    #allocation4 [shape = 's32[1]{0}', space=sflag, size = 0x4, scoped, tag = 'scoped memory for tpu_custom_call.1']
    #allocation5 [shape = 'u8[8192]{0}', space=vmem, size = 0x2000, scoped, tag = 'output window, operand 0, single buffered']
    %11 = vsyncpa [#allocation3], 0
    %12 = vsyncpa [#allocation4], 0
    // Predicated region
    $region2: #{tpu_custom_call.1} parent=1 // pred_check
      _
    $region3: #{tpu_custom_call.1} parent=1 // pred_check_branch
      %14 = sbr.rel (0) target = $region5
    $region4: #{tpu_custom_call.1} parent=1 // pred_region
      %s16 = ssub.s32 256, 256
      %17 = vsyncadd [#allocation3], %s16
      %s18 = sshll.u32 [#allocation2], 4
      %s19 = int_to_ptr.vmem [resolvable:$true] %s18
      %24 = dma.hbm_to_vmem [thread:$0]  %s0, 256, %s19, [#allocation3], 128, 128, 8
    $region5: #{tpu_custom_call.1} parent=1 // pred_fallthru
      _
    // Predicated region
    $region6: #{tpu_custom_call.1} parent=1 // pred_check
      _
    $region7: #{tpu_custom_call.1} parent=1 // pred_check_branch
      %26 = sbr.rel (0) target = $region9
    $region8: #{tpu_custom_call.1} parent=1 // pred_region
      _
    $region9: #{tpu_custom_call.1} parent=1 // pred_fallthru
      _
    // Predicated region
    $region10: #{tpu_custom_call.1} parent=1 // pred_check
      _
    $region11: #{tpu_custom_call.1} parent=1 // pred_check_branch
      %28 = sbr.rel (0) target = $region13
    $region12: #{tpu_custom_call.1} parent=1 // pred_region
      _
    $region13: #{tpu_custom_call.1} parent=1 // pred_fallthru
      _
    // Predicated region
    $region14: #{tpu_custom_call.1} parent=1 // pred_check
      _
    $region15: #{tpu_custom_call.1} parent=1 // pred_check_branch
      %30 = sbr.rel (0) target = $region17
    $region16: #{tpu_custom_call.1} parent=1 // pred_region
      %31 = dma.done [#allocation3], 256
    $region17: #{tpu_custom_call.1} parent=1 // pred_fallthru
      _
    loop: start=0, step=1, limit=2
    $region18: #{tpu_custom_call.1} parent=1 // loop_pre_header
      _
    $region19: #{tpu_custom_call.1} parent=1 // loop_header
      %s33 = sphi 0, %s37
      %p34 = scmp.ge.s32.totalorder %s33, 2
      %v38 = vphi 0.0, %v43
    $region20: #{tpu_custom_call.1} parent=1 // loop_header_branch
      %36 = sbr.rel (%p34) target = $region24
    $region21: #{tpu_custom_call.1} parent=1 // loop_body
      %s39 = smul.u32 %s33, 2
      %s40 = smul.addr %s39, 4
      %s41 = scalar_lea.vmem [#allocation2], %s40
      %v42 = vld [vmem:[%s41] sm:$0xff]
      %v43 = vadd.f32 %v38, %v42
    $region22: #{tpu_custom_call.1} parent=1 // loop_footer
      %s37 = sadd.s32 1, %s33
    $region23: #{tpu_custom_call.1} parent=1 // loop_footer_branch
      %32 = sbr.rel target = $region19
    $region24: #{tpu_custom_call.1} parent=1 // loop_exit
      _
    %v45 = vcombine.high %v38, %v38
    %vm47 = vcmask 1043456
    %v48 = vsel %vm47, %v38, 0.0
    %v49 = vsel %vm47, %v45, 0.0
    %v50 = vadd.f32 %v48, %v49
    %51 = vadd.xlane.f32.xlu0 %v50
    %v52 = vpop.xlane.xlu0 %51
    %v53 = vmul.f32 %v52, 0.001953125
    loop: start=0, step=1, limit=2
    $region25: #{tpu_custom_call.1} parent=1 // loop_pre_header
      _
    $region26: #{tpu_custom_call.1} parent=1 // loop_header
      %s55 = sphi 0, %s59
      %p56 = scmp.ge.s32.totalorder %s55, 2
      %v60 = vphi 0.0, %v76
    $region27: #{tpu_custom_call.1} parent=1 // loop_header_branch
      %58 = sbr.rel (%p56) target = $region31
    $region28: #{tpu_custom_call.1} parent=1 // loop_body
      %s61 = smul.u32 %s55, 2
      %s62 = smul.addr %s61, 4
      %s63 = scalar_lea.vmem [#allocation2], %s62
      %v64 = vld [vmem:[%s63] sm:$0xff]
      %v67 = vunpack.c.l.s4 839922192
      %v68 = vunpack.c.0.s8 %v67
      %v69 = vlaneseq
      %v70 = vshrl.u32 %v69, 7
      %v71 = vsub.s32 %v68, %v70
      %v72 = vrot.slane %v53, %v71
      %v74 = vsub.f32 %v64, %v72
      %v75 = vmul.f32 %v74, %v74
      %v76 = vadd.f32 %v60, %v75
    $region29: #{tpu_custom_call.1} parent=1 // loop_footer
      %s59 = sadd.s32 1, %s55
    $region30: #{tpu_custom_call.1} parent=1 // loop_footer_branch
      %54 = sbr.rel target = $region26
    $region31: #{tpu_custom_call.1} parent=1 // loop_exit
      _
    %v78 = vcombine.high %v60, %v60
    %v80 = vsel %vm47, %v60, 0.0
    %v81 = vsel %vm47, %v78, 0.0
    %v82 = vadd.f32 %v80, %v81
    %83 = vadd.xlane.f32.xlu0 %v82
    %v84 = vpop.xlane.xlu0 %83
    %v85 = vmul.f32 %v84, 0.001953125
    %v86 = vadd.f32 %v85, 1e-05
    %v87 = vrsqrt.pop %v86
    %v88 = vld [vmem:[%s1] sm:$0xf]
    %v89 = vmul.f32 %v87, %v88
    %v90 = vld [vmem:[%s2] sm:$0xf]
    %v91 = vmul.f32 %v53, %v89
    %v92 = vsub.f32 %v90, %v91
    %vm93 = vcmask 3072
    %94 = vst.msk [vmem:[%s4] sm:$0xf] %vm93, %v53
    %95 = vst.msk [vmem:[%s5] sm:$0xf] %vm93, %v85
    loop: start=0, step=1, limit=2
    $region32: #{tpu_custom_call.1} parent=1 // loop_pre_header
      _
    $region33: #{tpu_custom_call.1} parent=1 // loop_header
      %s97 = sphi 0, %s101
      %p98 = scmp.ge.s32.totalorder %s97, 2
    $region34: #{tpu_custom_call.1} parent=1 // loop_header_branch
      %100 = sbr.rel (%p98) target = $region38
    $region35: #{tpu_custom_call.1} parent=1 // loop_body
      %s102 = smul.u32 %s97, 2
      %s103 = smul.addr %s102, 4
      %s104 = scalar_lea.vmem [#allocation2], %s103
      %v105 = vld [vmem:[%s104] sm:$0xff]
      %107 = vset.pattern.permute.xlu0 0
      %108 = vperm.xlu0 %107, %v89
      %v109 = vpop.permute.xlu0 %108
      %v111 = vunpack.c.l.s4 839922192
      %v112 = vunpack.c.0.s8 %v111
      %v113 = vlaneseq
      %v114 = vshrl.u32 %v113, 7
      %v115 = vsub.s32 %v112, %v114
      %v116 = vrot.slane %v109, %v115
      %v118 = vmul.f32 %v105, %v116
      %120 = vset.pattern.permute.xlu0 0
      %121 = vperm.xlu0 %120, %v92
      %v122 = vpop.permute.xlu0 %121
      %v124 = vunpack.c.l.s4 839922192
      %v125 = vunpack.c.0.s8 %v124
      %v126 = vlaneseq
      %v127 = vshrl.u32 %v126, 7
      %v128 = vsub.s32 %v125, %v127
      %v129 = vrot.slane %v122, %v128
      %v131 = vadd.f32 %v118, %v129
      %s132 = smul.addr %s102, 4
      %s133 = scalar_lea.vmem [#allocation5], %s132
      %134 = vst [vmem:[%s133] sm:$0xff] %v131
    $region36: #{tpu_custom_call.1} parent=1 // loop_footer
      %s101 = sadd.s32 1, %s97
    $region37: #{tpu_custom_call.1} parent=1 // loop_footer_branch
      %96 = sbr.rel target = $region33
    $region38: #{tpu_custom_call.1} parent=1 // loop_exit
      _
    // Predicated region
    $region39: #{tpu_custom_call.1} parent=1 // pred_check
      _
    $region40: #{tpu_custom_call.1} parent=1 // pred_check_branch
      %136 = sbr.rel (0) target = $region42
    $region41: #{tpu_custom_call.1} parent=1 // pred_region
      %s138 = ssub.s32 256, 256
      %139 = vsyncadd [#allocation4], %s138
      %s140 = sshll.u32 [#allocation5], 4
      %s141 = int_to_ptr.vmem [resolvable:$true] %s140
      %146 = dma.vmem_to_hbm [thread:$0]  %s141, 256, %s3, [#allocation4], 128, 128, 8
    $region42: #{tpu_custom_call.1} parent=1 // pred_fallthru
      _
    // Predicated region
    $region43: #{tpu_custom_call.1} parent=1 // pred_check
      _
    $region44: #{tpu_custom_call.1} parent=1 // pred_check_branch
      %148 = sbr.rel (0) target = $region46
    $region45: #{tpu_custom_call.1} parent=1 // pred_region
      _
    $region46: #{tpu_custom_call.1} parent=1 // pred_fallthru
      _
    // Predicated region
    $region47: #{tpu_custom_call.1} parent=1 // pred_check
      _
    $region48: #{tpu_custom_call.1} parent=1 // pred_check_branch
      %150 = sbr.rel (0) target = $region50
    $region49: #{tpu_custom_call.1} parent=1 // pred_region
      _
    $region50: #{tpu_custom_call.1} parent=1 // pred_fallthru
      _
    // Predicated region
    $region51: #{tpu_custom_call.1} parent=1 // pred_check
      _
    $region52: #{tpu_custom_call.1} parent=1 // pred_check_branch
      %152 = sbr.rel (0) target = $region54
    $region53: #{tpu_custom_call.1} parent=1 // pred_region
      %153 = dma.done [#allocation4], 256
    $region54: #{tpu_custom_call.1} parent=1 // pred_fallthru
      _
    // Predicated region
    $region55: #{tpu_custom_call.1} parent=1 // pred_check
      _
    $region56: #{tpu_custom_call.1} parent=1 // pred_check_branch
      %155 = sbr.rel (0) target = $region58
    $region57: #{tpu_custom_call.1} parent=1 // pred_region
      _
    $region58: #{tpu_custom_call.1} parent=1 // pred_fallthru
      _
    // Predicated region
    $region59: #{tpu_custom_call.1} parent=1 // pred_check
      _
    $region60: #{tpu_custom_call.1} parent=1 // pred_check_branch
      %157 = sbr.rel (0) target = $region62
    $region61: #{tpu_custom_call.1} parent=1 // pred_region
      _
    $region62: #{tpu_custom_call.1} parent=1 // pred_fallthru
      _
    %158 = vsyncpa [#allocation3], 1
    %159 = vsyncpa [#allocation4], 1

</llo_original>
